<compile_context>
chip_gen: v7x
topology: tpu7x:2x2x1
jax: 0.10.0
libtpu: 0.0.40
codegen_flags: <defaults>
</compile_context>

<pallas_src>
import functools

import jax
import jax.numpy as jnp
import numpy as np
from jax import lax
from jax.experimental import pallas as pl
from jax.experimental.pallas import tpu as pltpu


def _cdiv(a, b):
    return -(-a // b)


def _round_up(x, m):
    return _cdiv(x, m) * m


def _plan_spatial(hw, s, itemsize, tile_budget_bytes):
    """Pick (lane_width, hw_chunk, num_data_chunks); hw_chunk is a 128-multiple."""
    if hw < 128:
        return hw, hw, 1
    cap = (hw // 128) * 128                       # a block may not exceed the array extent
    budget_cols = (tile_budget_bytes // max(1, s * itemsize)) // 128 * 128
    max_cols = max(128, min(cap, budget_cols))
    nchunks = _cdiv(hw, max_cols)
    # Size chunks evenly (rounded up to 128 lanes) to minimize tail overshoot.
    hw_chunk = min(max_cols, _round_up(_cdiv(hw, nchunks), 128))
    nchunks = _cdiv(hw, hw_chunk)
    return 128, hw_chunk, nchunks


def _denom_kernel(resp_ref, out_ref, *, npc, hw_chunk, lane_w, nsub, hw_total,
                  needs_mask):
    """Accumulate per-(batch, sample) spatial sums into the resident output block.

    resp_ref : (1, S, hw_chunk) tile of the *unnormalized* response map.
    out_ref  : (1, 1, S, lane_w) f32 lane-wise partial-sum accumulator, kept
               resident across the innermost ("arbitrary") spatial-chunk axis.
    """
    c = pl.program_id(2)

    @pl.when(c == 0)
    def _init():
        out_ref[...] = jnp.zeros_like(out_ref)

    zero = jnp.zeros(out_ref.shape[2:], jnp.float32)
    unroll = min(8, nsub)

    def add_slice(i, acc):
        off = pl.multiple_of(i * lane_w, lane_w)
        return acc + resp_ref[0, :, pl.ds(off, lane_w)].astype(jnp.float32)

    if not needs_mask:
        # Fast path: every chunk is fully in-bounds.  1 vld + 1 vadd per vreg.
        out_ref[0, 0] += lax.fori_loop(0, nsub, add_slice, zero, unroll=unroll)
    else:
        g = pl.program_id(1)
        start = (g * npc + c) * hw_chunk          # first global column of this chunk
        is_full = start + hw_chunk <= hw_total

        @pl.when(is_full)
        def _full_chunk():
            out_ref[0, 0] += lax.fori_loop(0, nsub, add_slice, zero, unroll=unroll)

        @pl.when(jnp.logical_not(is_full) & (start < hw_total))
        def _tail_chunk():
            def add_slice_masked(i, acc):
                off = pl.multiple_of(i * lane_w, lane_w)
                x = resp_ref[0, :, pl.ds(off, lane_w)].astype(jnp.float32)
                col = start + off + lax.broadcasted_iota(jnp.int32, x.shape, 1)
                return acc + jnp.where(col < hw_total, x, 0.0)

            out_ref[0, 0] += lax.fori_loop(0, nsub, add_slice_masked, zero)
        # start >= hw_total: fully out-of-range grid step (the index_map clamps
        # its DMA onto the last valid chunk); it contributes nothing.


def contrastive_relative_response_loss(response_map,
                                       source_feature_1d_locations,
                                       boundaries,
                                       eps=1e-10,
                                       tile_budget_bytes=8 << 20):
    B, S, H, W = response_map.shape
    HW = H * W
    itemsize = jnp.dtype(response_map.dtype).itemsize

    # Lane-dense reshape, dtype preserved through HBM (bf16 stays bf16).
    resp = response_map.reshape(B, S, HW)
    loc = source_feature_1d_locations.reshape(B, S).astype(jnp.int32)

    # Spatial chunk plan (~8 MiB tiles, multiples of 128 lanes).
    lane_w, hw_chunk, nchunks, = _plan_spatial(HW, S, itemsize, tile_budget_bytes)
    # Optional 2-way spatial split: keeps both v7x TensorCores busy when the
    # batch-parallel axis is small.  Harmless on single-TC v5e/v6e.
    n_split = 2 if (B < 4 and nchunks >= 2) else 1
    npc = _cdiv(nchunks, n_split)
    total_chunks = n_split * npc
    nsub = hw_chunk // lane_w

    needs_mask = total_chunks * hw_chunk != HW      # partial / extra grid steps exist
    needs_clamp = total_chunks > nchunks            # some grid step is fully OOB

    if needs_clamp:
        resp_index_map = lambda b, g, c: (b, 0, jnp.minimum(g * npc + c, nchunks - 1))
    else:
        resp_index_map = lambda b, g, c: (b, 0, g * npc + c)

    kernel = functools.partial(_denom_kernel, npc=npc, hw_chunk=hw_chunk,
                               lane_w=lane_w, nsub=nsub, hw_total=HW,
                               needs_mask=needs_mask)

    # Explicit scoped-VMEM budget: double-buffered resp tiles + resident output
    # block + headroom; capped at 32 MiB so the plan also fits v7x's 64 MiB VMEM.
    tile_bytes = S * hw_chunk * itemsize
    out_tile_bytes = S * lane_w * 4
    vmem_limit = int(min(32 << 20,
                         max(8 << 20, 2 * tile_bytes + 2 * out_tile_bytes + (2 << 20))))

    denom_parts = pl.pallas_call(
        kernel,
        out_shape=jax.ShapeDtypeStruct((B, n_split, S, lane_w), jnp.float32),
        grid_spec=pltpu.PrefetchScalarGridSpec(
            num_scalar_prefetch=0,
            grid=(B, n_split, npc),
            in_specs=[pl.BlockSpec((1, S, hw_chunk), resp_index_map)],
            out_specs=pl.BlockSpec((1, 1, S, lane_w), lambda b, g, c: (b, g, 0, 0)),
        ),
        compiler_params=pltpu.CompilerParams(
            dimension_semantics=("parallel", "parallel", "arbitrary"),
            vmem_limit_bytes=vmem_limit,
        ),
    )(resp)

    # (B, S) spatial denominator: reduce the split axis and the 128 lanes.
    denom = jnp.sum(denom_parts, axis=(1, 3))

    # O(B*S) data-dependent epilogue in the wrapper (per the perf review).
    # Exact: gather-then-normalize == normalize-then-gather for a per-row divide.
    raw = jnp.take_along_axis(resp, loc[:, :, None], axis=2)[..., 0]
    raw = raw.astype(jnp.float32)                                        # (B, S)
    b_s = jnp.take_along_axis(boundaries.reshape(B, HW), loc, axis=1)
    b_s = b_s.astype(jnp.float32)                                        # (B, S)

    sampled = raw / denom
    bsum = 1.0 + jnp.sum(b_s)
    pos = jnp.sum(b_s * -jnp.log(eps + sampled)) / bsum
    neg = jnp.sum(b_s * -jnp.log(eps + (1.0 - sampled))) / bsum
    return pos, neg


def _reference(response_map, source_feature_1d_locations, boundaries, eps=1e-10):
    B, S, H, W = response_map.shape
    rm = response_map / jnp.sum(response_map, axis=(2, 3), keepdims=True)
    rm_flat = rm.reshape(B, S, H * W)
    loc = source_feature_1d_locations.reshape(B, S, 1).astype(jnp.int32)
    sampled = jnp.take_along_axis(rm_flat, loc, axis=2)                  # (B,S,1)
    b_flat = jnp.broadcast_to(boundaries.reshape(B, 1, H * W), (B, S, H * W))
    sampled_b = jnp.take_along_axis(b_flat, loc, axis=2)                 # (B,S,1)
    bsum = 1.0 + jnp.sum(sampled_b)
    pos = jnp.sum(sampled_b * -jnp.log(eps + sampled)) / bsum
    neg = jnp.sum(sampled_b * -jnp.log(eps + (1.0 - sampled))) / bsum
    return pos, neg


if __name__ == "__main__":
    def run_case(key, B, S, H, W, tile_budget):
        k1, k2, k3 = jax.random.split(key, 3)
        response_map = jax.random.uniform(k1, (B, S, H, W), dtype=jnp.float32,
                                          minval=0.01, maxval=1.0)
        boundaries = (jax.random.uniform(k2, (B, 1, H, W)) > 0.4).astype(jnp.float32)
        loc = jax.random.randint(k3, (B, S), minval=0, maxval=H * W, dtype=jnp.int32)

        got = contrastive_relative_response_loss(
            response_map, loc, boundaries, tile_budget_bytes=tile_budget)
        got = jax.block_until_ready(got)
        want = jax.block_until_ready(_reference(response_map, loc, boundaries))

        np.testing.assert_allclose(np.asarray(got[0]), np.asarray(want[0]),
                                   rtol=1e-5, atol=1e-5)
        np.testing.assert_allclose(np.asarray(got[1]), np.asarray(want[1]),
                                   rtol=1e-5, atol=1e-5)

    key = jax.random.PRNGKey(0)
    k1, k2, k3 = jax.random.split(key, 3)
    # 1) Default plan: single full-width chunk, batch-parallel grid.
    run_case(k1, 2, 8, 16, 16, 8 << 20)
    # 2) Tiny tile budget: multi-chunk + 2-way spatial split + masked tail chunk.
    run_case(k2, 1, 8, 16, 25, 4096)
    # 3) Odd chunk count: clamped index_map skips the fully out-of-range step.
    run_case(k3, 1, 8, 16, 24, 4096)
    print("KERNEL_OK")
</pallas_src>

<mosaic_0001>
module attributes {stable_mosaic.version = 11 : i64} {
  func.func @_denom_kernel(%arg0: i32, %arg1: i32, %arg2: i32, %arg3: memref<1x8x256xf32, #tpu.memory_space<vmem>>, %arg4: memref<1x1x8x128xf32, #tpu.memory_space<vmem>>) attributes {dimension_semantics = [#tpu.dimension_semantics<parallel>, #tpu.dimension_semantics<parallel>, #tpu.dimension_semantics<arbitrary>], iteration_bounds = array<i64: 2, 1, 1>, scalar_prefetch = 0 : i64, scratch_operands = 0 : i64, tpu.core_type = #tpu.core_type<tc>, window_params = [{transform_indices = @transform_0, window_bounds = array<i64: 1, 8, 256>}, {transform_indices = @transform_1, window_bounds = array<i64: 1, 1, 8, 128>}]} {
    %c0_i32 = arith.constant 0 : i32
    %0 = arith.cmpi eq, %arg2, %c0_i32 : i32
    %1 = arith.extui %0 : i1 to i32
    %c0_i32_0 = arith.constant 0 : i32
    %2 = arith.cmpi ne, %1, %c0_i32_0 : i32
    scf.if %2 {
      %cst_14 = arith.constant 0.000000e+00 : f32
      %22 = vector.broadcast %cst_14 : f32 to vector<1x1x8x128xf32>
      %c0_15 = arith.constant 0 : index
      %c0_16 = arith.constant 0 : index
      %c0_17 = arith.constant 0 : index
      %c0_18 = arith.constant 0 : index
      %23 = vector.load %arg4[%c0_15, %c0_16, %c0_17, %c0_18] : memref<1x1x8x128xf32, #tpu.memory_space<vmem>>, vector<1x1x8x128xf32>
      tpu.vector_store %arg4[%c0_15, %c0_16, %c0_17, %c0_18], %22 {strides = array<i32>} : memref<1x1x8x128xf32, #tpu.memory_space<vmem>>, vector<1x1x8x128xf32>,
    } else {
    }
    %cst = arith.constant 0.000000e+00 : f32
    %3 = vector.broadcast %cst : f32 to vector<8x128xf32>
    %c0 = arith.constant 0 : index
    %c0_1 = arith.constant 0 : index
    %c0_2 = arith.constant 0 : index
    %c0_3 = arith.constant 0 : index
    %4 = vector.load %arg4[%c0, %c0_1, %c0_2, %c0_3] : memref<1x1x8x128xf32, #tpu.memory_space<vmem>>, vector<1x1x8x128xf32>
    %5 = vector.shape_cast %4 : vector<1x1x8x128xf32> to vector<8x128xf32>
    %c0_i32_4 = arith.constant 0 : i32
    %c128_i32 = arith.constant 128 : i32
    %6 = arith.muli %c0_i32_4, %c128_i32 : i32
    %7 = tpu.assume_multiple %6, 128 : i32
    %c0_5 = arith.constant 0 : index
    %c0_6 = arith.constant 0 : index
    %8 = arith.index_cast %7 : i32 to index
    %9 = vector.load %arg3[%c0_5, %c0_6, %8] : memref<1x8x256xf32, #tpu.memory_space<vmem>>, vector<1x8x128xf32>
    %10 = vector.shape_cast %9 : vector<1x8x128xf32> to vector<8x128xf32>
    %11 = arith.addf %3, %10 : vector<8x128xf32>
    %c1_i32 = arith.constant 1 : i32
    %c128_i32_7 = arith.constant 128 : i32
    %12 = arith.muli %c1_i32, %c128_i32_7 : i32
    %13 = tpu.assume_multiple %12, 128 : i32
    %c0_8 = arith.constant 0 : index
    %c0_9 = arith.constant 0 : index
    %14 = arith.index_cast %13 : i32 to index
    %15 = vector.load %arg3[%c0_8, %c0_9, %14] : memref<1x8x256xf32, #tpu.memory_space<vmem>>, vector<1x8x128xf32>
    %16 = vector.shape_cast %15 : vector<1x8x128xf32> to vector<8x128xf32>
    %17 = arith.addf %11, %16 : vector<8x128xf32>
    %c2_i32 = arith.constant 2 : i32
    %18 = arith.addf %5, %17 : vector<8x128xf32>
    %c0_10 = arith.constant 0 : index
    %c0_11 = arith.constant 0 : index
    %c0_12 = arith.constant 0 : index
    %c0_13 = arith.constant 0 : index
    %19 = vector.load %arg4[%c0_10, %c0_11, %c0_12, %c0_13] : memref<1x1x8x128xf32, #tpu.memory_space<vmem>>, vector<1x1x8x128xf32>
    %20 = vector.shape_cast %19 : vector<1x1x8x128xf32> to vector<8x128xf32>
    %21 = vector.shape_cast %18 : vector<8x128xf32> to vector<1x1x8x128xf32>
    tpu.vector_store %arg4[%c0_10, %c0_11, %c0_12, %c0_13], %21 {strides = array<i32>} : memref<1x1x8x128xf32, #tpu.memory_space<vmem>>, vector<1x1x8x128xf32>,
    return
  }
  func.func @transform_0(%arg0: i32, %arg1: i32, %arg2: i32) -> (i32, i32, i32) {
    %c1_i32 = arith.constant 1 : i32
    %0 = arith.muli %arg1, %c1_i32 : i32
    %1 = arith.addi %0, %arg2 : i32
    %c0_i32 = arith.constant 0 : i32
    %c0_i32_0 = arith.constant 0 : i32
    return %arg0, %c0_i32, %1 : i32, i32, i32
  }
  func.func @transform_1(%arg0: i32, %arg1: i32, %arg2: i32) -> (i32, i32, i32, i32) {
    %c0_i32 = arith.constant 0 : i32
    %c0_i32_0 = arith.constant 0 : i32
    %c0_i32_1 = arith.constant 0 : i32
    return %arg0, %arg1, %c0_i32, %c0_i32_0 : i32, i32, i32, i32
  }
}

</mosaic_0001>

<llo_original>
// kernel: tpu_custom_call.1
$region0: #{tpu_custom_call.1}
  #allocation0 [shape = 'u32[]', space=smem, size = 0x4, offset = 0x4, fixed_abs, tag = 'smem constant byte address 0x4 - core index']
  #allocation1 [shape = 'u32[144,128]{1,0:T(1,128)}', space=vmem, size = 0x12000, scoped, tag = 'internal scratch']
  %s0 = inlined_call_operand.hbm [shape: f32[2,8,256], index: 0, kind: input, shape index: {}]
  %s1 = inlined_call_operand.hbm [shape: f32[2,1,8,128], index: 1, kind: output, shape index: {}]
  %s2 = sld [smem:[#allocation0]]
  $region45: #{tpu_custom_call.1} parent=0
    _
  %s4 = ssub.s32 1, %s2
  %s5 = scalar_select 0, %s4, %s2
  $region1: #{tpu_custom_call.1} parent=0
    #allocation2 [shape = 'u8[16384]{0}', space=vmem, size = 0x4000, scoped, tag = 'input window, operand 0']
    #allocation3 [shape = 's32[2]{0}', space=sflag, size = 0x8, scoped, tag = 'scoped memory for tpu_custom_call.1']
    #allocation4 [shape = 's32[2]{0}', space=sflag, size = 0x8, scoped, tag = 'scoped memory for tpu_custom_call.1']
    #allocation5 [shape = 'u8[8192]{0}', space=vmem, size = 0x2000, scoped, tag = 'output window, operand 0']
    %6 = vsyncpa [#allocation3], 0
    %s7 = scalar_lea.sflag [#allocation3], 1
    %8 = vsyncpa %s7, 0
    %9 = vsyncpa [#allocation4], 0
    %s10 = scalar_lea.sflag [#allocation4], 1
    %11 = vsyncpa %s10, 0
    loop: start=0, step=1, limit=4
    $region2: #{tpu_custom_call.1} parent=1 // loop_pre_header
      _
    $region3: #{tpu_custom_call.1} parent=1 // loop_header
      %s13 = sphi 0, %s17
      %p14 = scmp.ge.s32.totalorder %s13, 4
      %s20 = sphi 0, %s39
      %s21 = sphi 0, %s35
      %s22 = sphi 0, %s31
      %s23 = sphi 0, %s20
      %s24 = sphi 0, %s21
      %s25 = sphi 0, %s22
      %s26 = sphi 0, %s23
      %s27 = sphi 0, %s24
      %s28 = sphi 0, %s25
      %s46 = sphi 0, %s48
      %s49 = sphi 0, %s46
      %s50 = sphi 0, %s49
      %s66 = sphi 0, %s50
      %s74 = sphi 0, %s76
      %s77 = sphi 0, %s74
      %s78 = sphi 0, %s77
      %s94 = sphi 0, %s78
    $region4: #{tpu_custom_call.1} parent=1 // loop_header_branch
      %16 = sbr.rel (%p14) target = $region8
    $region5: #{tpu_custom_call.1} parent=1 // loop_body
      %s18 = ssub.s32 %s13, 1
      %s19 = ssub.s32 %s13, 2
      %s29 = sadd.s32 1, %s22
      %p30 = scmp.ge.s32.totalorder %s29, 1
      %s31 = scalar_select %p30, 0, %s29
      %s32 = sadd.s32 1, %s21
      %s33 = scalar_select %p30, %s32, %s21
      %p34 = scmp.ge.s32.totalorder %s33, 1
      %s35 = scalar_select %p34, 0, %s33
      %s36 = sadd.s32 1, %s20
      %s37 = scalar_select %p34, %s36, %s20
      %p38 = scmp.ge.s32.totalorder %s37, 2
      %s39 = scalar_select %p38, 0, %s37
      %s40 = sadd.s32 %s21, %s22
      %s41 = sadd.s32 %s35, %s31
      %s42 = ssub.s32 %s20, %s39
      %s43 = ssub.s32 %s40, %s41
      %s44 = sor.u32 %s42, %s43
      %p45 = scmp.eq.s32.totalorder %s44, 0
      %s47 = sadd.s32 %s46, 1
      %s48 = scalar_select %p45, %s46, %s47
      %p51 = pneg %p45
      %p52 = scmp.eq.s32.totalorder %s13, 1
      %p53 = por %p51, %p52
      %p54 = scmp.ne.s32.totalorder %s46, %s49
      %p55 = scmp.eq.s32.totalorder %s13, 0
      %p56 = por %p54, %p55
      %p57 = scmp.ne.s32.totalorder %s46, %s49
      %p58 = scmp.eq.s32.totalorder %s18, 1
      %p59 = por %p57, %p58
      %p60 = scmp.ne.s32.totalorder %s49, %s50
      %p61 = scmp.eq.s32.totalorder %s18, 0
      %p62 = por %p60, %p61
      %p63 = scmp.ne.s32.totalorder %s49, %s50
      %p64 = scmp.eq.s32.totalorder %s19, 1
      %p65 = por %p63, %p64
      %p67 = scmp.ne.s32.totalorder %s50, %s66
      %p68 = scmp.eq.s32.totalorder %s19, 0
      %p69 = por %p67, %p68
      %s70 = ssub.s32 %s20, %s39
      %s71 = ssub.s32 %s21, %s35
      %s72 = sor.u32 %s70, %s71
      %p73 = scmp.eq.s32.totalorder %s72, 0
      %s75 = sadd.s32 %s74, 1
      %s76 = scalar_select %p73, %s74, %s75
      %p79 = pneg %p73
      %p80 = scmp.eq.s32.totalorder %s13, 1
      %p81 = por %p79, %p80
      %p82 = scmp.ne.s32.totalorder %s74, %s77
      %p83 = scmp.eq.s32.totalorder %s13, 0
      %p84 = por %p82, %p83
      %p85 = scmp.ne.s32.totalorder %s74, %s77
      %p86 = scmp.eq.s32.totalorder %s18, 1
      %p87 = por %p85, %p86
      %p88 = scmp.ne.s32.totalorder %s77, %s78
      %p89 = scmp.eq.s32.totalorder %s18, 0
      %p90 = por %p88, %p89
      %p91 = scmp.ne.s32.totalorder %s77, %s78
      %p92 = scmp.eq.s32.totalorder %s19, 1
      %p93 = por %p91, %p92
      %p95 = scmp.ne.s32.totalorder %s78, %s94
      %p96 = scmp.eq.s32.totalorder %s19, 0
      %p97 = por %p95, %p96
      %p98 = scmp.le.s32.totalorder 1, %s13
      %p99 = scmp.lt.s32.totalorder %s13, 3
      %p100 = pnand %p98, %p99
      %p101 = pneg %p100
      // Predicated region
      $region9: #{tpu_custom_call.1} parent=5 // pred_check
        _
      $region10: #{tpu_custom_call.1} parent=5 // pred_check_branch
        %103 = sbr.rel (%p100) target = $region12
      $region11: #{tpu_custom_call.1} parent=5 // pred_region
        %s104 = ssub.s32 %s13, 1
      $region12: #{tpu_custom_call.1} parent=5 // pred_fallthru
        _
      %p105 = scmp.lt.s32.totalorder %s13, 2
      // Predicated region
      $region13: #{tpu_custom_call.1} parent=5 // pred_check
        %p106 = pneg %p105
      $region14: #{tpu_custom_call.1} parent=5 // pred_check_branch
        %108 = sbr.rel (%p106) target = $region16
      $region15: #{tpu_custom_call.1} parent=5 // pred_region
        // Predicated region
        $region17: #{tpu_custom_call.1} parent=15 // pred_check
          %p109 = pneg %p56
        $region18: #{tpu_custom_call.1} parent=15 // pred_check_branch
          %111 = sbr.rel (%p109) target = $region20
        $region19: #{tpu_custom_call.1} parent=15 // pred_region
          %s112 = sand.u32 %s46, 1
          %s113 = scalar_lea.sflag [#allocation3], %s112
          %s114 = sand.u32 %s46, 1
          %s115 = smul.addr %s114, 16
          %s116 = scalar_lea.vmem [#allocation2], %s115
          %s117 = sadd.s32 %s21, %s22
          %s118 = smul.u32 2, %s117
          %s120 = ssub.s32 256, 256
          %121 = vsyncadd %s113, %s120
          %s122 = smul.addr %s20, 2
          %s123 = sadd.s32 %s118, %s122
          %s124 = smul.addr %s123, 128
          %s125 = scalar_lea.hbm %s0, %s124
          %s127 = sshll.u32 %s116, 4
          %s128 = int_to_ptr.vmem [resolvable:$true] %s127
          %130 = dma.hbm_to_vmem [thread:$0]  %s125, 256, %s128, %s113
        $region20: #{tpu_custom_call.1} parent=15 // pred_fallthru
          _
      $region16: #{tpu_custom_call.1} parent=5 // pred_fallthru
        _
      %p131 = scmp.le.s32.totalorder 1, %s13
      %p132 = scmp.lt.s32.totalorder %s13, 3
      %p133 = pnand %p131, %p132
      %p134 = pneg %p133
      // Predicated region
      $region21: #{tpu_custom_call.1} parent=5 // pred_check
        _
      $region22: #{tpu_custom_call.1} parent=5 // pred_check_branch
        %136 = sbr.rel (%p133) target = $region24
      $region23: #{tpu_custom_call.1} parent=5 // pred_region
        %s137 = ssub.s32 %s13, 1
        %s138 = sand.u32 %s49, 1
        %s139 = scalar_lea.sflag [#allocation3], %s138
        %s140 = sand.u32 %s49, 1
        %s141 = smul.addr %s140, 16
        %s142 = scalar_lea.vmem [#allocation2], %s141
        // Predicated region
        $region25: #{tpu_custom_call.1} parent=23 // pred_check
          %p143 = pneg %p62
        $region26: #{tpu_custom_call.1} parent=23 // pred_check_branch
          %145 = sbr.rel (%p143) target = $region28
        $region27: #{tpu_custom_call.1} parent=23 // pred_region
          %146 = dma.done %s139, 256
        $region28: #{tpu_custom_call.1} parent=23 // pred_fallthru
          _
        %s147 = sand.u32 %s49, 1
        %s148 = scalar_lea.sflag [#allocation3], %s147
        %s149 = sand.u32 %s49, 1
        %s150 = smul.addr %s149, 16
        %s151 = scalar_lea.vmem [#allocation2], %s150
        %p152 = pneg %p62
        %p153 = pneg %p59
        %p154 = pneg %p90
        %p155 = pneg %p87
        %s156 = sand.u32 %s77, 1
        %s157 = scalar_lea.sflag [#allocation4], %s156
        %s158 = sand.u32 %s77, 1
        %s159 = smul.addr %s158, 8
        %s160 = scalar_lea.vmem [#allocation5], %s159
        %s161 = sadd.s32 %s24, %s25
        %s162 = smul.u32 2, %s161
        %p163 = scmp.eq.s32.totalorder %s25, 0
        // Predicated region
        $region29: #{tpu_custom_call.1} parent=23 // pred_check
          %p164 = pneg %p163
        $region30: #{tpu_custom_call.1} parent=23 // pred_check_branch
          %166 = sbr.rel (%p164) target = $region32
        $region31: #{tpu_custom_call.1} parent=23 // pred_region
          %167 = vst [vmem:[%s160] sm:$0xff] 0.0
        $region32: #{tpu_custom_call.1} parent=23 // pred_fallthru
          _
        %v168 = vld [vmem:[%s160] sm:$0xff]
        %v169 = vld [vmem:[%s142] sm:$0xff]
        %v170 = vadd.f32 %v169, 0.0
        %s171 = scalar_lea.vmem %s142, 8 [#allocation2]
        %v172 = vld [vmem:[%s171] sm:$0xff]
        %v173 = vadd.f32 %v170, %v172
        %v174 = vadd.f32 %v168, %v173
        %175 = vst [vmem:[%s160] sm:$0xff] %v174
        %s176 = sand.u32 %s77, 1
        %s177 = scalar_lea.sflag [#allocation4], %s176
        %s178 = sand.u32 %s77, 1
        %s179 = smul.addr %s178, 8
        %s180 = scalar_lea.vmem [#allocation5], %s179
        // Predicated region
        $region33: #{tpu_custom_call.1} parent=23 // pred_check
          %p181 = pneg %p87
        $region34: #{tpu_custom_call.1} parent=23 // pred_check_branch
          %183 = sbr.rel (%p181) target = $region36
        $region35: #{tpu_custom_call.1} parent=23 // pred_region
          %s185 = ssub.s32 128, 128
          %186 = vsyncadd %s177, %s185
          %s187 = sadd.s32 %s24, %s23
          %s188 = smul.addr %s187, 128
          %s189 = scalar_lea.hbm %s1, %s188
          %s191 = sshll.u32 %s180, 4
          %s192 = int_to_ptr.vmem [resolvable:$true] %s191
          %194 = dma.vmem_to_hbm [thread:$0]  %s192, 128, %s189, %s177
        $region36: #{tpu_custom_call.1} parent=23 // pred_fallthru
          _
      $region24: #{tpu_custom_call.1} parent=5 // pred_fallthru
        _
      %p195 = scmp.le.s32.totalorder 2, %s13
      // Predicated region
      $region37: #{tpu_custom_call.1} parent=5 // pred_check
        %p196 = pneg %p195
      $region38: #{tpu_custom_call.1} parent=5 // pred_check_branch
        %198 = sbr.rel (%p196) target = $region40
      $region39: #{tpu_custom_call.1} parent=5 // pred_region
        %s199 = ssub.s32 %s13, 2
        // Predicated region
        $region41: #{tpu_custom_call.1} parent=39 // pred_check
          %p200 = pneg %p93
        $region42: #{tpu_custom_call.1} parent=39 // pred_check_branch
          %202 = sbr.rel (%p200) target = $region44
        $region43: #{tpu_custom_call.1} parent=39 // pred_region
          %s203 = sand.u32 %s78, 1
          %s204 = scalar_lea.sflag [#allocation4], %s203
          %s205 = sand.u32 %s78, 1
          %s206 = smul.addr %s205, 8
          %s207 = scalar_lea.vmem [#allocation5], %s206
          %208 = dma.done %s204, 128
        $region44: #{tpu_custom_call.1} parent=39 // pred_fallthru
          _
      $region40: #{tpu_custom_call.1} parent=5 // pred_fallthru
        _
    $region6: #{tpu_custom_call.1} parent=1 // loop_footer
      %s17 = sadd.s32 1, %s13
    $region7: #{tpu_custom_call.1} parent=1 // loop_footer_branch
      %12 = sbr.rel target = $region3
    $region8: #{tpu_custom_call.1} parent=1 // loop_exit
      _
    %209 = vsyncpa [#allocation3], 1
    %s210 = scalar_lea.sflag [#allocation3], 1
    %211 = vsyncpa %s210, 1
    %212 = vsyncpa [#allocation4], 1
    %s213 = scalar_lea.sflag [#allocation4], 1
    %214 = vsyncpa %s213, 1

</llo_original>
